<compile_context>
chip_gen: v5e
topology: v5e:2x2
jax: 0.10.0
libtpu: 0.0.40
codegen_flags: <defaults>
</compile_context>

<pallas_src>
import jax
import jax.numpy as jnp
import numpy as np
from jax.experimental import pallas as pl
from jax.experimental.pallas import tpu as pltpu


def attflat_kernel(x_ref, bias_ref, w1_ref, b1_ref, w2_ref, b2_ref,
                   wm_ref, bm_ref, out_ref):
    TB, S, H = x_ref.shape
    G = w2_ref.shape[1]
    cdt = w1_ref.dtype                 # matmul-operand dtype (f32, or bf16 on v6e/v7x)

    x = x_ref[...]                     # (TB, S, H)
    x2d = x.reshape(TB * S, H)         # leading-dim merge only (no lane crossing)

    # --- MLP: Linear(H->MID) -> ReLU -> Linear(MID->G), fused over the batch tile ---
    h = jnp.dot(x2d, w1_ref[...], preferred_element_type=jnp.float32) + b1_ref[...]
    h = jnp.maximum(h, 0.0)                                            # (TB*S, MID) f32
    logits = (jnp.dot(h.astype(cdt), w2_ref[...],
                      preferred_element_type=jnp.float32)
              + b2_ref[...])                                           # (TB*S, G) f32

    # --- masked softmax over the sequence axis (additive -1e9 bias, pre-broadcast) ---
    logits = logits.reshape(TB, S, G) + bias_ref[...]                  # (TB, S, G)
    m = jnp.max(logits, axis=1, keepdims=True)                         # (TB, 1, G)
    e = jnp.exp(logits - m)
    denom = jnp.sum(e, axis=1, keepdims=True)
    att = e * pl.reciprocal(denom, approx=True)                        # (TB, S, G)

    # --- glimpse-weighted sums: (TB,S,G) x (TB,S,H) -> (TB,G,H), one batched contraction ---
    atted = jax.lax.dot_general(att.astype(cdt), x,
                                (((1,), (1,)), ((0,), (0,))),
                                preferred_element_type=jnp.float32)    # (TB, G, H) f32

    # --- linear_merge: out = concat_g(atted[:, g, :]) @ Wm + bm ---
    # G is tiny and static; each iteration is an M=TB matmul (no M=1 MXU pushes,
    # no in-kernel lane-crossing reshape of atted).
    acc = jnp.zeros(out_ref.shape, jnp.float32)                        # (TB, OUT_PAD)
    for g in range(G):
        acc = acc + jnp.dot(atted[:, g, :].astype(cdt), wm_ref[g],
                            preferred_element_type=jnp.float32)
    out_ref[...] = (acc + bm_ref[...]).astype(out_ref.dtype)


def attflat(x, x_mask, w1, b1, w2, b2, wm, bm, *, use_bf16=False, batch_tile=None):
    """x: (B,S,H) f32, x_mask: (B,1,1,S) bool.  wm: (G,H,OUT).  Returns (B, OUT) f32.

    use_bf16=True casts the matmul operands to bfloat16 (recommended on v6e/v7x);
    softmax / accumulation stay f32.
    """
    B, S, H = x.shape
    MID = w1.shape[1]
    G = w2.shape[1]
    OUT = wm.shape[2]

    # Batch tile: amortize per-grid-step pipeline overhead over TB rows.
    if batch_tile is None:
        TB = 8 if B <= 8 else (16 if B <= 128 else 32)
    else:
        TB = batch_tile
    B_pad = -(-B // TB) * TB

    # Lane-dense output: pad OUT up to a multiple of 128 so the final store is an
    # unmasked vst; padding is sliced off below.
    OUT_PAD = -(-OUT // 128) * 128

    cdt = jnp.bfloat16 if use_bf16 else jnp.float32

    # Additive mask bias (-1e9 where padded), pre-broadcast over glimpses so it
    # matches the (TB, S, G) logits layout with no in-kernel relayout.
    mask_bias = jnp.where(x_mask.reshape(B, S, 1),
                          jnp.float32(-1000000000.0),
                          jnp.float32(0.0)).astype(jnp.float32)
    mask_bias = jnp.broadcast_to(mask_bias, (B, S, G))

    x_p = x
    bias_p = mask_bias
    if B_pad != B:
        x_p = jnp.pad(x_p, ((0, B_pad - B), (0, 0), (0, 0)))
        bias_p = jnp.pad(bias_p, ((0, B_pad - B), (0, 0), (0, 0)))

    wm_p = wm
    bm_p = bm
    if OUT_PAD != OUT:
        wm_p = jnp.pad(wm_p, ((0, 0), (0, 0), (0, OUT_PAD - OUT)))
        bm_p = jnp.pad(bm_p, ((0, OUT_PAD - OUT),))

    x_p = x_p.astype(cdt)
    w1_c = w1.astype(cdt)
    w2_c = w2.astype(cdt)
    wm_c = wm_p.astype(cdt)
    b1_2d = b1.reshape(1, MID).astype(jnp.float32)
    b2_2d = b2.reshape(1, G).astype(jnp.float32)
    bm_2d = bm_p.reshape(1, OUT_PAD).astype(jnp.float32)

    grid_spec = pltpu.PrefetchScalarGridSpec(
        num_scalar_prefetch=0,
        grid=(B_pad // TB,),
        in_specs=[
            pl.BlockSpec((TB, S, H), lambda b: (b, 0, 0)),        # x (batch tile)
            pl.BlockSpec((TB, S, G), lambda b: (b, 0, 0)),        # additive mask bias
            pl.BlockSpec((H, MID), lambda b: (0, 0)),             # w1
            pl.BlockSpec((1, MID), lambda b: (0, 0)),             # b1
            pl.BlockSpec((MID, G), lambda b: (0, 0)),             # w2
            pl.BlockSpec((1, G), lambda b: (0, 0)),               # b2
            pl.BlockSpec((G, H, OUT_PAD), lambda b: (0, 0, 0)),   # wm (merge, glimpse-major)
            pl.BlockSpec((1, OUT_PAD), lambda b: (0, 0)),         # bm
        ],
        out_specs=pl.BlockSpec((TB, OUT_PAD), lambda b: (b, 0)),
    )

    # Advisory cost estimate for the surrounding XLA schedule.
    elt = 2 if use_bf16 else 4
    cost = pl.CostEstimate(
        flops=2 * B * S * (H * MID + MID * G) + 2 * B * G * S * H + 2 * B * G * H * OUT,
        transcendentals=B * S * G,
        bytes_accessed=(elt * (B * S * H + H * MID + MID * G + G * H * OUT)
                        + 4 * (B * S * G + MID + G + OUT + B * OUT)),
    )

    out = pl.pallas_call(
        attflat_kernel,
        out_shape=jax.ShapeDtypeStruct((B_pad, OUT_PAD), jnp.float32),
        grid_spec=grid_spec,
        compiler_params=pltpu.CompilerParams(
            dimension_semantics=("parallel",)),
        cost_estimate=cost,
    )(x_p, bias_p, w1_c, b1_2d, w2_c, b2_2d, wm_c, bm_2d)

    return out[:B, :OUT]


def attflat_reference(x, x_mask, w1, b1, w2, b2, wm, bm):
    """Pure-JAX reference mirroring the PyTorch forward."""
    B, S, H = x.shape
    G = w2.shape[1]
    OUT = wm.shape[2]
    h = jax.nn.relu(x @ w1 + b1)                      # (B,S,MID)
    logits = h @ w2 + b2                              # (B,S,G)
    mask = x_mask.reshape(B, S, 1)
    logits = jnp.where(mask, -1000000000.0, logits)
    att = jax.nn.softmax(logits, axis=1)
    atted = jnp.einsum('bsg,bsh->bgh', att, x).reshape(B, G * H)
    wm_flat = wm.reshape(G * H, OUT)
    return atted @ wm_flat + bm


if __name__ == "__main__":
    # Small config consistent with the module's __C:
    #   HIDDEN_SIZE=32, FLAT_MLP_SIZE=32, FLAT_GLIMPSES=2, FLAT_OUT_SIZE=64
    B, S, H, MID, G, OUT = 2, 8, 32, 32, 2, 64

    key = jax.random.PRNGKey(0)
    k_x, k_w1, k_b1, k_w2, k_b2, k_wm, k_bm = jax.random.split(key, 7)

    x = jax.random.normal(k_x, (B, S, H), dtype=jnp.float32)

    # mask: True = padded position; mask the tail of each sequence.
    seq_lens = jnp.array([6, 5], dtype=jnp.int32)
    pos = jnp.arange(S)[None, :]
    x_mask = (pos >= seq_lens[:, None]).reshape(B, 1, 1, S)   # (B,1,1,S) bool

    # Deterministic parameter init (already transposed for y = x @ W + b).
    w1 = jax.random.normal(k_w1, (H, MID), dtype=jnp.float32) * 0.1   # mlp fc1
    b1 = jax.random.normal(k_b1, (MID,), dtype=jnp.float32) * 0.1
    w2 = jax.random.normal(k_w2, (MID, G), dtype=jnp.float32) * 0.1   # mlp fc2
    b2 = jax.random.normal(k_b2, (G,), dtype=jnp.float32) * 0.1
    # linear_merge: PyTorch weight is (OUT, G*H); its transpose (G*H, OUT)
    # is stored glimpse-major as (G, H, OUT) so the kernel needs no reshape.
    wm = jax.random.normal(k_wm, (G, H, OUT), dtype=jnp.float32) * 0.1
    bm = jax.random.normal(k_bm, (OUT,), dtype=jnp.float32) * 0.1

    out = attflat(x, x_mask, w1, b1, w2, b2, wm, bm)
    out = jax.block_until_ready(out)

    ref = attflat_reference(x, x_mask, w1, b1, w2, b2, wm, bm)
    # Tolerance loosened slightly vs. 1e-5 because the kernel uses the EUP
    # approximate reciprocal for the softmax denominator.
    np.testing.assert_allclose(np.asarray(out), np.asarray(ref),
                               rtol=5e-3, atol=5e-3)

    print("KERNEL_OK")
</pallas_src>

<mosaic_0001>
module attributes {stable_mosaic.version = 11 : i64} {
  func.func @attflat_kernel(%arg0: i32, %arg1: memref<8x8x32xf32, #tpu.memory_space<vmem>>, %arg2: memref<8x8x2xf32, #tpu.memory_space<vmem>>, %arg3: memref<32x32xf32, #tpu.memory_space<vmem>>, %arg4: memref<1x32xf32, #tpu.memory_space<vmem>>, %arg5: memref<32x2xf32, #tpu.memory_space<vmem>>, %arg6: memref<1x2xf32, #tpu.memory_space<vmem>>, %arg7: memref<2x32x128xf32, #tpu.memory_space<vmem>>, %arg8: memref<1x128xf32, #tpu.memory_space<vmem>>, %arg9: memref<8x128xf32, #tpu.memory_space<vmem>>) attributes {dimension_semantics = [#tpu.dimension_semantics<parallel>], iteration_bounds = array<i64: 1>, scalar_prefetch = 0 : i64, scratch_operands = 0 : i64, tpu.core_type = #tpu.core_type<tc>, window_params = [{transform_indices = @transform_0, window_bounds = array<i64: 8, 8, 32>}, {transform_indices = @transform_1, window_bounds = array<i64: 8, 8, 2>}, {pipeline_mode = #tpu.pipeline_mode<synchronous>, transform_indices = @transform_2, window_bounds = array<i64: 32, 32>}, {pipeline_mode = #tpu.pipeline_mode<synchronous>, transform_indices = @transform_3, window_bounds = array<i64: 1, 32>}, {pipeline_mode = #tpu.pipeline_mode<synchronous>, transform_indices = @transform_4, window_bounds = array<i64: 32, 2>}, {pipeline_mode = #tpu.pipeline_mode<synchronous>, transform_indices = @transform_5, window_bounds = array<i64: 1, 2>}, {pipeline_mode = #tpu.pipeline_mode<synchronous>, transform_indices = @transform_6, window_bounds = array<i64: 2, 32, 128>}, {pipeline_mode = #tpu.pipeline_mode<synchronous>, transform_indices = @transform_7, window_bounds = array<i64: 1, 128>}, {transform_indices = @transform_8, window_bounds = array<i64: 8, 128>}]} {
    %c0 = arith.constant 0 : index
    %c0_0 = arith.constant 0 : index
    %c0_1 = arith.constant 0 : index
    %0 = vector.load %arg1[%c0, %c0_0, %c0_1] : memref<8x8x32xf32, #tpu.memory_space<vmem>>, vector<8x8x32xf32>
    %1 = vector.shape_cast %0 : vector<8x8x32xf32> to vector<64x32xf32>
    %c0_2 = arith.constant 0 : index
    %c0_3 = arith.constant 0 : index
    %2 = vector.load %arg3[%c0_2, %c0_3] : memref<32x32xf32, #tpu.memory_space<vmem>>, vector<32x32xf32>
    %cst = arith.constant dense<0.000000e+00> : vector<64x32xf32>
    %3 = tpu.matmul %1, %2, %cst {dimension_numbers = #tpu.dot_dimension_numbers<[1], [0], [0], [1], [0, 0, 1, 1], [], []>} : vector<64x32xf32>, vector<32x32xf32>, vector<64x32xf32> -> vector<64x32xf32>
    %c0_4 = arith.constant 0 : index
    %c0_5 = arith.constant 0 : index
    %4 = vector.load %arg4[%c0_4, %c0_5] : memref<1x32xf32, #tpu.memory_space<vmem>>, vector<1x32xf32>
    %5 = vector.broadcast %4 : vector<1x32xf32> to vector<64x32xf32>
    %6 = arith.addf %3, %5 : vector<64x32xf32>
    %cst_6 = arith.constant 0.000000e+00 : f32
    %7 = vector.broadcast %cst_6 : f32 to vector<64x32xf32>
    %8 = arith.maximumf %6, %7 : vector<64x32xf32>
    %c0_7 = arith.constant 0 : index
    %c0_8 = arith.constant 0 : index
    %9 = vector.load %arg5[%c0_7, %c0_8] : memref<32x2xf32, #tpu.memory_space<vmem>>, vector<32x2xf32>
    %cst_9 = arith.constant dense<0.000000e+00> : vector<64x2xf32>
    %10 = tpu.matmul %8, %9, %cst_9 {dimension_numbers = #tpu.dot_dimension_numbers<[1], [0], [0], [1], [0, 0, 1, 1], [], []>} : vector<64x32xf32>, vector<32x2xf32>, vector<64x2xf32> -> vector<64x2xf32>
    %c0_10 = arith.constant 0 : index
    %c0_11 = arith.constant 0 : index
    %11 = vector.load %arg6[%c0_10, %c0_11] : memref<1x2xf32, #tpu.memory_space<vmem>>, vector<1x2xf32>
    %12 = vector.broadcast %11 : vector<1x2xf32> to vector<64x2xf32>
    %13 = arith.addf %10, %12 : vector<64x2xf32>
    %14 = vector.shape_cast %13 : vector<64x2xf32> to vector<8x8x2xf32>
    %c0_12 = arith.constant 0 : index
    %c0_13 = arith.constant 0 : index
    %c0_14 = arith.constant 0 : index
    %15 = vector.load %arg2[%c0_12, %c0_13, %c0_14] : memref<8x8x2xf32, #tpu.memory_space<vmem>>, vector<8x8x2xf32>
    %16 = arith.addf %14, %15 : vector<8x8x2xf32>
    %cst_15 = arith.constant dense<0xFF800000> : vector<8x2xf32>
    %17 = vector.multi_reduction <maximumf>, %16, %cst_15 [1] : vector<8x8x2xf32> to vector<8x2xf32>
    %18 = vector.shape_cast %17 : vector<8x2xf32> to vector<8x1x2xf32>
    %19 = vector.broadcast %18 : vector<8x1x2xf32> to vector<8x8x2xf32>
    %20 = arith.subf %16, %19 : vector<8x8x2xf32>
    %21 = math.exp %20 : vector<8x8x2xf32>
    %cst_16 = arith.constant dense<0.000000e+00> : vector<8x2xf32>
    %22 = vector.multi_reduction <add>, %21, %cst_16 [1] : vector<8x8x2xf32> to vector<8x2xf32>
    %23 = vector.shape_cast %22 : vector<8x2xf32> to vector<8x1x2xf32>
    %24 = tpu.reciprocal %23 {approx = true} : vector<8x1x2xf32> -> vector<8x1x2xf32>
    %25 = vector.broadcast %24 : vector<8x1x2xf32> to vector<8x8x2xf32>
    %26 = arith.mulf %21, %25 : vector<8x8x2xf32>
    %cst_17 = arith.constant dense<0.000000e+00> : vector<8x2x32xf32>
    %27 = tpu.matmul %26, %0, %cst_17 {dimension_numbers = #tpu.dot_dimension_numbers<[1], [1], [2], [2], [0, 0, 0, 2, 1, 2], [0], [0]>} : vector<8x8x2xf32>, vector<8x8x32xf32>, vector<8x2x32xf32> -> vector<8x2x32xf32>
    %cst_18 = arith.constant 0.000000e+00 : f32
    %28 = vector.broadcast %cst_18 : f32 to vector<8x128xf32>
    %29 = vector.extract_strided_slice %27 {offsets = [0, 0, 0], sizes = [8, 1, 32], strides = [1, 1, 1]} : vector<8x2x32xf32> to vector<8x1x32xf32>
    %30 = vector.shape_cast %29 : vector<8x1x32xf32> to vector<8x32xf32>
    %c0_19 = arith.constant 0 : index
    %c0_20 = arith.constant 0 : index
    %c0_21 = arith.constant 0 : index
    %31 = vector.load %arg7[%c0_19, %c0_20, %c0_21] : memref<2x32x128xf32, #tpu.memory_space<vmem>>, vector<1x32x128xf32>
    %32 = vector.shape_cast %31 : vector<1x32x128xf32> to vector<32x128xf32>
    %cst_22 = arith.constant dense<0.000000e+00> : vector<8x128xf32>
    %33 = tpu.matmul %30, %32, %cst_22 {dimension_numbers = #tpu.dot_dimension_numbers<[1], [0], [0], [1], [0, 0, 1, 1], [], []>} : vector<8x32xf32>, vector<32x128xf32>, vector<8x128xf32> -> vector<8x128xf32>
    %34 = arith.addf %28, %33 : vector<8x128xf32>
    %35 = vector.extract_strided_slice %27 {offsets = [0, 1, 0], sizes = [8, 1, 32], strides = [1, 1, 1]} : vector<8x2x32xf32> to vector<8x1x32xf32>
    %36 = vector.shape_cast %35 : vector<8x1x32xf32> to vector<8x32xf32>
    %c1 = arith.constant 1 : index
    %c0_23 = arith.constant 0 : index
    %c0_24 = arith.constant 0 : index
    %37 = vector.load %arg7[%c1, %c0_23, %c0_24] : memref<2x32x128xf32, #tpu.memory_space<vmem>>, vector<1x32x128xf32>
    %38 = vector.shape_cast %37 : vector<1x32x128xf32> to vector<32x128xf32>
    %cst_25 = arith.constant dense<0.000000e+00> : vector<8x128xf32>
    %39 = tpu.matmul %36, %38, %cst_25 {dimension_numbers = #tpu.dot_dimension_numbers<[1], [0], [0], [1], [0, 0, 1, 1], [], []>} : vector<8x32xf32>, vector<32x128xf32>, vector<8x128xf32> -> vector<8x128xf32>
    %40 = arith.addf %34, %39 : vector<8x128xf32>
    %c0_26 = arith.constant 0 : index
    %c0_27 = arith.constant 0 : index
    %41 = vector.load %arg8[%c0_26, %c0_27] : memref<1x128xf32, #tpu.memory_space<vmem>>, vector<1x128xf32>
    %42 = vector.broadcast %41 : vector<1x128xf32> to vector<8x128xf32>
    %43 = arith.addf %40, %42 : vector<8x128xf32>
    %c0_28 = arith.constant 0 : index
    %c0_29 = arith.constant 0 : index
    %44 = vector.load %arg9[%c0_28, %c0_29] : memref<8x128xf32, #tpu.memory_space<vmem>>, vector<8x128xf32>
    tpu.vector_store %arg9[%c0_28, %c0_29], %43 {strides = array<i32>} : memref<8x128xf32, #tpu.memory_space<vmem>>, vector<8x128xf32>,
    return
  }
  func.func @transform_0(%arg0: i32) -> (i32, i32, i32) {
    %c0_i32 = arith.constant 0 : i32
    %c0_i32_0 = arith.constant 0 : i32
    %c0_i32_1 = arith.constant 0 : i32
    return %arg0, %c0_i32, %c0_i32_0 : i32, i32, i32
  }
  func.func @transform_1(%arg0: i32) -> (i32, i32, i32) {
    %c0_i32 = arith.constant 0 : i32
    %c0_i32_0 = arith.constant 0 : i32
    %c0_i32_1 = arith.constant 0 : i32
    return %arg0, %c0_i32, %c0_i32_0 : i32, i32, i32
  }
  func.func @transform_2(%arg0: i32) -> (i32, i32) {
    %c0_i32 = arith.constant 0 : i32
    %c0_i32_0 = arith.constant 0 : i32
    %c0_i32_1 = arith.constant 0 : i32
    return %c0_i32, %c0_i32_0 : i32, i32
  }
  func.func @transform_3(%arg0: i32) -> (i32, i32) {
    %c0_i32 = arith.constant 0 : i32
    %c0_i32_0 = arith.constant 0 : i32
    %c0_i32_1 = arith.constant 0 : i32
    return %c0_i32, %c0_i32_0 : i32, i32
  }
  func.func @transform_4(%arg0: i32) -> (i32, i32) {
    %c0_i32 = arith.constant 0 : i32
    %c0_i32_0 = arith.constant 0 : i32
    %c0_i32_1 = arith.constant 0 : i32
    return %c0_i32, %c0_i32_0 : i32, i32
  }
  func.func @transform_5(%arg0: i32) -> (i32, i32) {
    %c0_i32 = arith.constant 0 : i32
    %c0_i32_0 = arith.constant 0 : i32
    %c0_i32_1 = arith.constant 0 : i32
    return %c0_i32, %c0_i32_0 : i32, i32
  }
  func.func @transform_6(%arg0: i32) -> (i32, i32, i32) {
    %c0_i32 = arith.constant 0 : i32
    %c0_i32_0 = arith.constant 0 : i32
    %c0_i32_1 = arith.constant 0 : i32
    %c0_i32_2 = arith.constant 0 : i32
    return %c0_i32, %c0_i32_0, %c0_i32_1 : i32, i32, i32
  }
  func.func @transform_7(%arg0: i32) -> (i32, i32) {
    %c0_i32 = arith.constant 0 : i32
    %c0_i32_0 = arith.constant 0 : i32
    %c0_i32_1 = arith.constant 0 : i32
    return %c0_i32, %c0_i32_0 : i32, i32
  }
  func.func @transform_8(%arg0: i32) -> (i32, i32) {
    %c0_i32 = arith.constant 0 : i32
    %c0_i32_0 = arith.constant 0 : i32
    return %arg0, %c0_i32 : i32, i32
  }
}

</mosaic_0001>

<llo_original>
// kernel: tpu_custom_call.1
$region0: #{tpu_custom_call.1}
  #allocation0 [shape = 'u32[]', space=smem, size = 0x4, offset = 0x4, fixed_abs, tag = 'smem constant byte address 0x4 - core index']
  #allocation1 [shape = 'u32[72,128]{1,0:T(1,128)}', space=vmem, size = 0x9000, scoped, tag = 'internal scratch']
  %s0 = inlined_call_operand.vmem [shape: f32[8,8,32], index: 0, kind: input, shape index: {}]
  %s1 = inlined_call_operand.vmem [shape: f32[8,8,2], index: 1, kind: input, shape index: {}]
  %s2 = inlined_call_operand.vmem [shape: f32[32,32], index: 2, kind: input, shape index: {}]
  %s3 = inlined_call_operand.vmem [shape: f32[1,32], index: 3, kind: input, shape index: {}]
  %s4 = inlined_call_operand.vmem [shape: f32[32,2], index: 4, kind: input, shape index: {}]
  %s5 = inlined_call_operand.vmem [shape: f32[1,2], index: 5, kind: input, shape index: {}]
  %s6 = inlined_call_operand.hbm [shape: f32[2,32,128], index: 6, kind: input, shape index: {}]
  %s7 = inlined_call_operand.vmem [shape: f32[1,128], index: 7, kind: input, shape index: {}]
  %s8 = inlined_call_operand.hbm [shape: f32[8,128], index: 8, kind: output, shape index: {}]
  %s9 = sld [smem:[#allocation0]]
  $region46: #{tpu_custom_call.1} parent=0
    _
  %s11 = ssub.s32 1, %s9
  %s12 = scalar_select 0, %s11, %s9
  $region1: #{tpu_custom_call.1} parent=0
    #allocation2 [shape = 'u8[32768]{0}', space=vmem, size = 0x8000, scoped, tag = 'input window, operand 6, single buffered']
    #allocation3 [shape = 's32[1]{0}', space=sflag, size = 0x4, scoped, tag = 'scoped memory for tpu_custom_call.1']
    #allocation4 [shape = 's32[1]{0}', space=sflag, size = 0x4, scoped, tag = 'scoped memory for tpu_custom_call.1']
    #allocation5 [shape = 'u8[4096]{0}', space=vmem, size = 0x1000, scoped, tag = 'output window, operand 0, single buffered']
    %13 = vsyncpa [#allocation3], 0
    %14 = vsyncpa [#allocation4], 0
    // Predicated region
    $region2: #{tpu_custom_call.1} parent=1 // pred_check
      _
    $region3: #{tpu_custom_call.1} parent=1 // pred_check_branch
      %16 = sbr.rel (0) target = $region5
    $region4: #{tpu_custom_call.1} parent=1 // pred_region
      _
    $region5: #{tpu_custom_call.1} parent=1 // pred_fallthru
      _
    // Predicated region
    $region6: #{tpu_custom_call.1} parent=1 // pred_check
      _
    $region7: #{tpu_custom_call.1} parent=1 // pred_check_branch
      %18 = sbr.rel (0) target = $region9
    $region8: #{tpu_custom_call.1} parent=1 // pred_region
      _
    $region9: #{tpu_custom_call.1} parent=1 // pred_fallthru
      _
    // Predicated region
    $region10: #{tpu_custom_call.1} parent=1 // pred_check
      _
    $region11: #{tpu_custom_call.1} parent=1 // pred_check_branch
      %20 = sbr.rel (0) target = $region13
    $region12: #{tpu_custom_call.1} parent=1 // pred_region
      _
    $region13: #{tpu_custom_call.1} parent=1 // pred_fallthru
      _
    // Predicated region
    $region14: #{tpu_custom_call.1} parent=1 // pred_check
      _
    $region15: #{tpu_custom_call.1} parent=1 // pred_check_branch
      %22 = sbr.rel (0) target = $region17
    $region16: #{tpu_custom_call.1} parent=1 // pred_region
      _
    $region17: #{tpu_custom_call.1} parent=1 // pred_fallthru
      _
    // Predicated region
    $region18: #{tpu_custom_call.1} parent=1 // pred_check
      _
    $region19: #{tpu_custom_call.1} parent=1 // pred_check_branch
      %24 = sbr.rel (0) target = $region21
    $region20: #{tpu_custom_call.1} parent=1 // pred_region
      _
    $region21: #{tpu_custom_call.1} parent=1 // pred_fallthru
      _
    // Predicated region
    $region22: #{tpu_custom_call.1} parent=1 // pred_check
      _
    $region23: #{tpu_custom_call.1} parent=1 // pred_check_branch
      %26 = sbr.rel (0) target = $region25
    $region24: #{tpu_custom_call.1} parent=1 // pred_region
      _
    $region25: #{tpu_custom_call.1} parent=1 // pred_fallthru
      _
    // Predicated region
    $region26: #{tpu_custom_call.1} parent=1 // pred_check
      _
    $region27: #{tpu_custom_call.1} parent=1 // pred_check_branch
      %28 = sbr.rel (0) target = $region29
    $region28: #{tpu_custom_call.1} parent=1 // pred_region
      %30 = vsyncadd [#allocation3], 0
      %s31 = sshll.u32 %s6, 4
      %s32 = int_to_ptr.hbm [resolvable:$true] %s31
      %s33 = sshll.u32 [#allocation2], 4
      %s34 = int_to_ptr.vmem [resolvable:$true] %s33
      %39 = dma.hbm_to_vmem [thread:$0]  %s32, 1024, %s34, [#allocation3], 128, 128, 8
    $region29: #{tpu_custom_call.1} parent=1 // pred_fallthru
      _
    // Predicated region
    $region30: #{tpu_custom_call.1} parent=1 // pred_check
      _
    $region31: #{tpu_custom_call.1} parent=1 // pred_check_branch
      %41 = sbr.rel (0) target = $region33
    $region32: #{tpu_custom_call.1} parent=1 // pred_region
      _
    $region33: #{tpu_custom_call.1} parent=1 // pred_fallthru
      _
    // Predicated region
    $region34: #{tpu_custom_call.1} parent=1 // pred_check
      _
    $region35: #{tpu_custom_call.1} parent=1 // pred_check_branch
      %43 = sbr.rel (0) target = $region37
    $region36: #{tpu_custom_call.1} parent=1 // pred_region
      %45 = dma.done [#allocation3], 1024
    $region37: #{tpu_custom_call.1} parent=1 // pred_fallthru
      _
    %v46 = vld [vmem:[%s0] sm:$0xff]
    %v47 = vld [vmem:[%s0 + $0x8] sm:$0xff]
    %v48 = vld [vmem:[%s0 + $0x10] sm:$0xff]
    %v49 = vld [vmem:[%s0 + $0x18] sm:$0xff]
    %v50 = vld [vmem:[%s0 + $0x20] sm:$0xff]
    %v51 = vld [vmem:[%s0 + $0x28] sm:$0xff]
    %v52 = vld [vmem:[%s0 + $0x30] sm:$0xff]
    %v53 = vld [vmem:[%s0 + $0x38] sm:$0xff]
    %v54 = vld [vmem:[%s2] sm:$0xff]
    %v55 = vld [vmem:[%s2 + $0x8] sm:$0xff]
    %v56 = vld [vmem:[%s2 + $0x10] sm:$0xff]
    %v57 = vld [vmem:[%s2 + $0x18] sm:$0xff]
    %v58 = vld [vmem:[%s3] sm:$0x1]
    %v60 = vperm.slane %v58, 0
    %vm62 = vcmask 261120
    %v64 = vsel %vm62, %v46, 0
    %v67 = vsel %vm62, %v47, 0
    %v70 = vsel %vm62, %v48, 0
    %v73 = vsel %vm62, %v49, 0
    %v76 = vsel %vm62, %v50, 0
    %v79 = vsel %vm62, %v51, 0
    %v82 = vsel %vm62, %v52, 0
    %v85 = vsel %vm62, %v53, 0
    %87 = vmatpush.msra.mxu0 0.0
    %88 = vmatpush.msra.mxu0 0.0
    %89 = vmatpush.msra.mxu0 0.0
    %90 = vmatpush.msra.mxu0 0.0
    %91 = vmatpush.msra.mxu0 0.0
    %92 = vmatpush.msra.mxu0 0.0
    %93 = vmatpush.msra.mxu0 0.0
    %94 = vmatpush.msra.mxu0 0.0
    %95 = vmatpush.msra.mxu0 0.0
    %96 = vmatpush.msra.mxu0 0.0
    %97 = vmatpush.msra.mxu0 0.0
    %98 = vmatpush.msra.mxu0 0.0
    %99 = vmatpush.msra.mxu0 %v57
    %100 = vmatpush.msra.mxu0 %v56
    %101 = vmatpush.msra.mxu0 %v55
    %102 = vmatpush.msra.mxu0 %v54
    %103 = vmatmul.f32.gmra.mxu0 %v64
    %v104 = vpop.f32.mrf.mxu0
    %v105 = vadd.f32 %v60, %v104
    %106 = vmatmul.f32.gmra.mxu0 %v67
    %v107 = vpop.f32.mrf.mxu0
    %v108 = vadd.f32 %v60, %v107
    %109 = vmatmul.f32.gmra.mxu0 %v70
    %v110 = vpop.f32.mrf.mxu0
    %v111 = vadd.f32 %v60, %v110
    %112 = vmatmul.f32.gmra.mxu0 %v73
    %v113 = vpop.f32.mrf.mxu0
    %v114 = vadd.f32 %v60, %v113
    %115 = vmatmul.f32.gmra.mxu0 %v76
    %v116 = vpop.f32.mrf.mxu0
    %v117 = vadd.f32 %v60, %v116
    %118 = vmatmul.f32.gmra.mxu0 %v79
    %v119 = vpop.f32.mrf.mxu0
    %v120 = vadd.f32 %v60, %v119
    %121 = vmatmul.f32.gmra.mxu0 %v82
    %v122 = vpop.f32.mrf.mxu0
    %v123 = vadd.f32 %v60, %v122
    %124 = vmatmul.f32.gmra.mxu0 %v85
    %v125 = vpop.f32.mrf.mxu0
    %v126 = vadd.f32 %v60, %v125
    %127 = vdwg.mxu0
    %v128 = vmax.f32 %v105, 0.0
    %v129 = vmax.f32 %v108, 0.0
    %v130 = vmax.f32 %v111, 0.0
    %v131 = vmax.f32 %v114, 0.0
    %v132 = vmax.f32 %v117, 0.0
    %v133 = vmax.f32 %v120, 0.0
    %v134 = vmax.f32 %v123, 0.0
    %v135 = vmax.f32 %v126, 0.0
    %v136 = vld [vmem:[%s4] sm:$0xff]
    %v137 = vld [vmem:[%s4 + $0x8] sm:$0xff]
    %v138 = vld [vmem:[%s4 + $0x10] sm:$0xff]
    %v139 = vld [vmem:[%s4 + $0x18] sm:$0xff]
    %v140 = vld [vmem:[%s5] sm:$0x1]
    %v142 = vperm.slane %v140, 0
    %v145 = vsel %vm62, %v128, 0
    %v148 = vsel %vm62, %v129, 0
    %v151 = vsel %vm62, %v130, 0
    %v154 = vsel %vm62, %v131, 0
    %v157 = vsel %vm62, %v132, 0
    %v160 = vsel %vm62, %v133, 0
    %v163 = vsel %vm62, %v134, 0
    %v166 = vsel %vm62, %v135, 0
    %168 = vmatpush.msra.mxu0 0.0
    %169 = vmatpush.msra.mxu0 0.0
    %170 = vmatpush.msra.mxu0 0.0
    %171 = vmatpush.msra.mxu0 0.0
    %172 = vmatpush.msra.mxu0 0.0
    %173 = vmatpush.msra.mxu0 0.0
    %174 = vmatpush.msra.mxu0 0.0
    %175 = vmatpush.msra.mxu0 0.0
    %176 = vmatpush.msra.mxu0 0.0
    %177 = vmatpush.msra.mxu0 0.0
    %178 = vmatpush.msra.mxu0 0.0
    %179 = vmatpush.msra.mxu0 0.0
    %180 = vmatpush.msra.mxu0 %v139
    %181 = vmatpush.msra.mxu0 %v138
    %182 = vmatpush.msra.mxu0 %v137
    %183 = vmatpush.msra.mxu0 %v136
    %184 = vmatmul.f32.gmra.mxu0 %v145
    %v185 = vpop.f32.mrf.mxu0
    %v186 = vadd.f32 %v142, %v185
    %187 = vmatmul.f32.gmra.mxu0 %v148
    %v188 = vpop.f32.mrf.mxu0
    %v189 = vadd.f32 %v142, %v188
    %190 = vmatmul.f32.gmra.mxu0 %v151
    %v191 = vpop.f32.mrf.mxu0
    %v192 = vadd.f32 %v142, %v191
    %193 = vmatmul.f32.gmra.mxu0 %v154
    %v194 = vpop.f32.mrf.mxu0
    %v195 = vadd.f32 %v142, %v194
    %196 = vmatmul.f32.gmra.mxu0 %v157
    %v197 = vpop.f32.mrf.mxu0
    %v198 = vadd.f32 %v142, %v197
    %199 = vmatmul.f32.gmra.mxu0 %v160
    %v200 = vpop.f32.mrf.mxu0
    %v201 = vadd.f32 %v142, %v200
    %202 = vmatmul.f32.gmra.mxu0 %v163
    %v203 = vpop.f32.mrf.mxu0
    %v204 = vadd.f32 %v142, %v203
    %205 = vmatmul.f32.gmra.mxu0 %v166
    %v206 = vpop.f32.mrf.mxu0
    %v207 = vadd.f32 %v142, %v206
    %208 = vdwg.mxu0
    %v209 = vld [vmem:[%s1] sm:$0xff]
    %v210 = vld [vmem:[%s1 + $0x8] sm:$0xff]
    %v211 = vld [vmem:[%s1 + $0x10] sm:$0xff]
    %v212 = vld [vmem:[%s1 + $0x18] sm:$0xff]
    %v213 = vld [vmem:[%s1 + $0x20] sm:$0xff]
    %v214 = vld [vmem:[%s1 + $0x28] sm:$0xff]
    %v215 = vld [vmem:[%s1 + $0x30] sm:$0xff]
    %v216 = vld [vmem:[%s1 + $0x38] sm:$0xff]
    %v217 = vadd.f32 %v186, %v209
    %v218 = vadd.f32 %v189, %v210
    %v219 = vadd.f32 %v192, %v211
    %v220 = vadd.f32 %v195, %v212
    %v221 = vadd.f32 %v198, %v213
    %v222 = vadd.f32 %v201, %v214
    %v223 = vadd.f32 %v204, %v215
    %v224 = vadd.f32 %v207, %v216
    %vm225 = vcmask 15360
    %v226 = vsel %vm225, %v217, -inf
    %v227 = vrot.slane %v226, 4
    %v228 = vmax.f32 %v226, %v227
    %v229 = vrot.slane %v228, 2
    %v230 = vmax.f32 %v228, %v229
    %v231 = vrot.slane %v230, 1
    %v232 = vmax.f32 %v230, %v231
    %v233 = vsel %vm225, %v218, -inf
    %v234 = vrot.slane %v233, 4
    %v235 = vmax.f32 %v233, %v234
    %v236 = vrot.slane %v235, 2
    %v237 = vmax.f32 %v235, %v236
    %v238 = vrot.slane %v237, 1
    %v239 = vmax.f32 %v237, %v238
    %v240 = vsel %vm225, %v219, -inf
    %v241 = vrot.slane %v240, 4
    %v242 = vmax.f32 %v240, %v241
    %v243 = vrot.slane %v242, 2
    %v244 = vmax.f32 %v242, %v243
    %v245 = vrot.slane %v244, 1
    %v246 = vmax.f32 %v244, %v245
    %v247 = vsel %vm225, %v220, -inf
    %v248 = vrot.slane %v247, 4
    %v249 = vmax.f32 %v247, %v248
    %v250 = vrot.slane %v249, 2
    %v251 = vmax.f32 %v249, %v250
    %v252 = vrot.slane %v251, 1
    %v253 = vmax.f32 %v251, %v252
    %v254 = vsel %vm225, %v221, -inf
    %v255 = vrot.slane %v254, 4
    %v256 = vmax.f32 %v254, %v255
    %v257 = vrot.slane %v256, 2
    %v258 = vmax.f32 %v256, %v257
    %v259 = vrot.slane %v258, 1
    %v260 = vmax.f32 %v258, %v259
    %v261 = vsel %vm225, %v222, -inf
    %v262 = vrot.slane %v261, 4
    %v263 = vmax.f32 %v261, %v262
    %v264 = vrot.slane %v263, 2
    %v265 = vmax.f32 %v263, %v264
    %v266 = vrot.slane %v265, 1
    %v267 = vmax.f32 %v265, %v266
    %v268 = vsel %vm225, %v223, -inf
    %v269 = vrot.slane %v268, 4
    %v270 = vmax.f32 %v268, %v269
    %v271 = vrot.slane %v270, 2
    %v272 = vmax.f32 %v270, %v271
    %v273 = vrot.slane %v272, 1
    %v274 = vmax.f32 %v272, %v273
    %v275 = vsel %vm225, %v224, -inf
    %v276 = vrot.slane %v275, 4
    %v277 = vmax.f32 %v275, %v276
    %v278 = vrot.slane %v277, 2
    %v279 = vmax.f32 %v277, %v278
    %v280 = vrot.slane %v279, 1
    %v281 = vmax.f32 %v279, %v280
    %v282 = vsub.f32 %v217, %v232
    %v283 = vsub.f32 %v218, %v239
    %v284 = vsub.f32 %v219, %v246
    %v285 = vsub.f32 %v220, %v253
    %v286 = vsub.f32 %v221, %v260
    %v287 = vsub.f32 %v222, %v267
    %v288 = vsub.f32 %v223, %v274
    %v289 = vsub.f32 %v224, %v281
    %v290 = vmul.f32 %v282, 1.442695
    %v291 = vpow.pop %v290
    %v292 = vmul.f32 %v283, 1.442695
    %v293 = vpow.pop %v292
    %v294 = vmul.f32 %v284, 1.442695
    %v295 = vpow.pop %v294
    %v296 = vmul.f32 %v285, 1.442695
    %v297 = vpow.pop %v296
    %v298 = vmul.f32 %v286, 1.442695
    %v299 = vpow.pop %v298
    %v300 = vmul.f32 %v287, 1.442695
    %v301 = vpow.pop %v300
    %v302 = vmul.f32 %v288, 1.442695
    %v303 = vpow.pop %v302
    %v304 = vmul.f32 %v289, 1.442695
    %v305 = vpow.pop %v304
    %v306 = vsel %vm225, %v291, 0.0
    %v307 = vrot.slane %v306, 4
    %v308 = vadd.f32 %v306, %v307
    %v309 = vrot.slane %v308, 2
    %v310 = vadd.f32 %v308, %v309
    %v311 = vrot.slane %v310, 1
    %v312 = vadd.f32 %v310, %v311
    %v313 = vsel %vm225, %v293, 0.0
    %v314 = vrot.slane %v313, 4
    %v315 = vadd.f32 %v313, %v314
    %v316 = vrot.slane %v315, 2
    %v317 = vadd.f32 %v315, %v316
    %v318 = vrot.slane %v317, 1
    %v319 = vadd.f32 %v317, %v318
    %v320 = vsel %vm225, %v295, 0.0
    %v321 = vrot.slane %v320, 4
    %v322 = vadd.f32 %v320, %v321
    %v323 = vrot.slane %v322, 2
    %v324 = vadd.f32 %v322, %v323
    %v325 = vrot.slane %v324, 1
    %v326 = vadd.f32 %v324, %v325
    %v327 = vsel %vm225, %v297, 0.0
    %v328 = vrot.slane %v327, 4
    %v329 = vadd.f32 %v327, %v328
    %v330 = vrot.slane %v329, 2
    %v331 = vadd.f32 %v329, %v330
    %v332 = vrot.slane %v331, 1
    %v333 = vadd.f32 %v331, %v332
    %v334 = vsel %vm225, %v299, 0.0
    %v335 = vrot.slane %v334, 4
    %v336 = vadd.f32 %v334, %v335
    %v337 = vrot.slane %v336, 2
    %v338 = vadd.f32 %v336, %v337
    %v339 = vrot.slane %v338, 1
    %v340 = vadd.f32 %v338, %v339
    %v341 = vsel %vm225, %v301, 0.0
    %v342 = vrot.slane %v341, 4
    %v343 = vadd.f32 %v341, %v342
    %v344 = vrot.slane %v343, 2
    %v345 = vadd.f32 %v343, %v344
    %v346 = vrot.slane %v345, 1
    %v347 = vadd.f32 %v345, %v346
    %v348 = vsel %vm225, %v303, 0.0
    %v349 = vrot.slane %v348, 4
    %v350 = vadd.f32 %v348, %v349
    %v351 = vrot.slane %v350, 2
    %v352 = vadd.f32 %v350, %v351
    %v353 = vrot.slane %v352, 1
    %v354 = vadd.f32 %v352, %v353
    %v355 = vsel %vm225, %v305, 0.0
    %v356 = vrot.slane %v355, 4
    %v357 = vadd.f32 %v355, %v356
    %v358 = vrot.slane %v357, 2
    %v359 = vadd.f32 %v357, %v358
    %v360 = vrot.slane %v359, 1
    %v361 = vadd.f32 %v359, %v360
    %v362 = vrcp.pop %v312
    %v363 = vrcp.pop %v319
    %v364 = vrcp.pop %v326
    %v365 = vrcp.pop %v333
    %v366 = vrcp.pop %v340
    %v367 = vrcp.pop %v347
    %v368 = vrcp.pop %v354
    %v369 = vrcp.pop %v361
    %v370 = vmul.f32 %v291, %v362
    %v371 = vmul.f32 %v293, %v363
    %v372 = vmul.f32 %v295, %v364
    %v373 = vmul.f32 %v297, %v365
    %v374 = vmul.f32 %v299, %v366
    %v375 = vmul.f32 %v301, %v367
    %v376 = vmul.f32 %v303, %v368
    %v377 = vmul.f32 %v305, %v369
    %378 = vxpose.xlu0.b32.start [1/16] %v370, 128
    %379 = vxpose.xlu0.b32.cont [2/16] 0.0, 128
    %380 = vxpose.xlu0.b32.cont [3/16] 0.0, 128
    %381 = vxpose.xlu0.b32.cont [4/16] 0.0, 128
    %382 = vxpose.xlu0.b32.cont [5/16] 0.0, 128
    %383 = vxpose.xlu0.b32.cont [6/16] 0.0, 128
    %384 = vxpose.xlu0.b32.cont [7/16] 0.0, 128
    %385 = vxpose.xlu0.b32.cont [8/16] 0.0, 128
    %386 = vxpose.xlu0.b32.cont [9/16] 0.0, 128
    %387 = vxpose.xlu0.b32.cont [10/16] 0.0, 128
    %388 = vxpose.xlu0.b32.cont [11/16] 0.0, 128
    %389 = vxpose.xlu0.b32.cont [12/16] 0.0, 128
    %390 = vxpose.xlu0.b32.cont [13/16] 0.0, 128
    %391 = vxpose.xlu0.b32.cont [14/16] 0.0, 128
    %392 = vxpose.xlu0.b32.cont [15/16] 0.0, 128
    %393 = vxpose.xlu0.b32.end [16/16] 0.0, 128
    %v394 = vpop.trf.xlu0
    %v395 = vpop.trf.xlu0
    %v396 = vpop.trf.xlu0
    %v397 = vpop.trf.xlu0
    %v398 = vpop.trf.xlu0
    %v399 = vpop.trf.xlu0
    %v400 = vpop.trf.xlu0
    %v401 = vpop.trf.xlu0
    %v402 = vpop.trf.xlu0
    %v403 = vpop.trf.xlu0
    %v404 = vpop.trf.xlu0
    %v405 = vpop.trf.xlu0
    %v406 = vpop.trf.xlu0
    %v407 = vpop.trf.xlu0
    %v408 = vpop.trf.xlu0
    %v409 = vpop.trf.xlu0
    %vm410 = vcmask 64512
    %v412 = vsel %vm410, %v394, 0
    %414 = vmatpush.msra.mxu0 0.0
    %415 = vmatpush.msra.mxu0 0.0
    %416 = vmatpush.msra.mxu0 0.0
    %417 = vmatpush.msra.mxu0 0.0
    %418 = vmatpush.msra.mxu0 0.0
    %419 = vmatpush.msra.mxu0 0.0
    %420 = vmatpush.msra.mxu0 0.0
    %421 = vmatpush.msra.mxu0 0.0
    %422 = vmatpush.msra.mxu0 0.0
    %423 = vmatpush.msra.mxu0 0.0
    %424 = vmatpush.msra.mxu0 0.0
    %425 = vmatpush.msra.mxu0 0.0
    %426 = vmatpush.msra.mxu0 0.0
    %427 = vmatpush.msra.mxu0 0.0
    %428 = vmatpush.msra.mxu0 0.0
    %429 = vmatpush.msra.mxu0 %v46
    %430 = vmatmul.f32.gmra.mxu0 %v412
    %v431 = vpop.f32.mrf.mxu0
    %v432 = vadd.f32 0.0, %v431
    %433 = vdwg.mxu0
    %434 = vxpose.xlu0.b32.start [1/16] %v371, 128
    %435 = vxpose.xlu0.b32.cont [2/16] 0.0, 128
    %436 = vxpose.xlu0.b32.cont [3/16] 0.0, 128
    %437 = vxpose.xlu0.b32.cont [4/16] 0.0, 128
    %438 = vxpose.xlu0.b32.cont [5/16] 0.0, 128
    %439 = vxpose.xlu0.b32.cont [6/16] 0.0, 128
    %440 = vxpose.xlu0.b32.cont [7/16] 0.0, 128
    %441 = vxpose.xlu0.b32.cont [8/16] 0.0, 128
    %442 = vxpose.xlu0.b32.cont [9/16] 0.0, 128
    %443 = vxpose.xlu0.b32.cont [10/16] 0.0, 128
    %444 = vxpose.xlu0.b32.cont [11/16] 0.0, 128
    %445 = vxpose.xlu0.b32.cont [12/16] 0.0, 128
    %446 = vxpose.xlu0.b32.cont [13/16] 0.0, 128
    %447 = vxpose.xlu0.b32.cont [14/16] 0.0, 128
    %448 = vxpose.xlu0.b32.cont [15/16] 0.0, 128
    %449 = vxpose.xlu0.b32.end [16/16] 0.0, 128
    %v450 = vpop.trf.xlu0
    %v451 = vpop.trf.xlu0
    %v452 = vpop.trf.xlu0
    %v453 = vpop.trf.xlu0
    %v454 = vpop.trf.xlu0
    %v455 = vpop.trf.xlu0
    %v456 = vpop.trf.xlu0
    %v457 = vpop.trf.xlu0
    %v458 = vpop.trf.xlu0
    %v459 = vpop.trf.xlu0
    %v460 = vpop.trf.xlu0
    %v461 = vpop.trf.xlu0
    %v462 = vpop.trf.xlu0
    %v463 = vpop.trf.xlu0
    %v464 = vpop.trf.xlu0
    %v465 = vpop.trf.xlu0
    %v467 = vsel %vm410, %v450, 0
    %469 = vmatpush.msra.mxu0 0.0
    %470 = vmatpush.msra.mxu0 0.0
    %471 = vmatpush.msra.mxu0 0.0
    %472 = vmatpush.msra.mxu0 0.0
    %473 = vmatpush.msra.mxu0 0.0
    %474 = vmatpush.msra.mxu0 0.0
    %475 = vmatpush.msra.mxu0 0.0
    %476 = vmatpush.msra.mxu0 0.0
    %477 = vmatpush.msra.mxu0 0.0
    %478 = vmatpush.msra.mxu0 0.0
    %479 = vmatpush.msra.mxu0 0.0
    %480 = vmatpush.msra.mxu0 0.0
    %481 = vmatpush.msra.mxu0 0.0
    %482 = vmatpush.msra.mxu0 0.0
    %483 = vmatpush.msra.mxu0 0.0
    %484 = vmatpush.msra.mxu0 %v47
    %485 = vmatmul.f32.gmra.mxu0 %v467
    %v486 = vpop.f32.mrf.mxu0
    %v487 = vadd.f32 0.0, %v486
    %488 = vdwg.mxu0
    %489 = vxpose.xlu0.b32.start [1/16] %v372, 128
    %490 = vxpose.xlu0.b32.cont [2/16] 0.0, 128
    %491 = vxpose.xlu0.b32.cont [3/16] 0.0, 128
    %492 = vxpose.xlu0.b32.cont [4/16] 0.0, 128
    %493 = vxpose.xlu0.b32.cont [5/16] 0.0, 128
    %494 = vxpose.xlu0.b32.cont [6/16] 0.0, 128
    %495 = vxpose.xlu0.b32.cont [7/16] 0.0, 128
    %496 = vxpose.xlu0.b32.cont [8/16] 0.0, 128
    %497 = vxpose.xlu0.b32.cont [9/16] 0.0, 128
    %498 = vxpose.xlu0.b32.cont [10/16] 0.0, 128
    %499 = vxpose.xlu0.b32.cont [11/16] 0.0, 128
    %500 = vxpose.xlu0.b32.cont [12/16] 0.0, 128
    %501 = vxpose.xlu0.b32.cont [13/16] 0.0, 128
    %502 = vxpose.xlu0.b32.cont [14/16] 0.0, 128
    %503 = vxpose.xlu0.b32.cont [15/16] 0.0, 128
    %504 = vxpose.xlu0.b32.end [16/16] 0.0, 128
    %v505 = vpop.trf.xlu0
    %v506 = vpop.trf.xlu0
    %v507 = vpop.trf.xlu0
    %v508 = vpop.trf.xlu0
    %v509 = vpop.trf.xlu0
    %v510 = vpop.trf.xlu0
    %v511 = vpop.trf.xlu0
    %v512 = vpop.trf.xlu0
    %v513 = vpop.trf.xlu0
    %v514 = vpop.trf.xlu0
    %v515 = vpop.trf.xlu0
    %v516 = vpop.trf.xlu0
    %v517 = vpop.trf.xlu0
    %v518 = vpop.trf.xlu0
    %v519 = vpop.trf.xlu0
    %v520 = vpop.trf.xlu0
    %v522 = vsel %vm410, %v505, 0
    %524 = vmatpush.msra.mxu0 0.0
    %525 = vmatpush.msra.mxu0 0.0
    %526 = vmatpush.msra.mxu0 0.0
    %527 = vmatpush.msra.mxu0 0.0
    %528 = vmatpush.msra.mxu0 0.0
    %529 = vmatpush.msra.mxu0 0.0
    %530 = vmatpush.msra.mxu0 0.0
    %531 = vmatpush.msra.mxu0 0.0
    %532 = vmatpush.msra.mxu0 0.0
    %533 = vmatpush.msra.mxu0 0.0
    %534 = vmatpush.msra.mxu0 0.0
    %535 = vmatpush.msra.mxu0 0.0
    %536 = vmatpush.msra.mxu0 0.0
    %537 = vmatpush.msra.mxu0 0.0
    %538 = vmatpush.msra.mxu0 0.0
    %539 = vmatpush.msra.mxu0 %v48
    %540 = vmatmul.f32.gmra.mxu0 %v522
    %v541 = vpop.f32.mrf.mxu0
    %v542 = vadd.f32 0.0, %v541
    %543 = vdwg.mxu0
    %544 = vxpose.xlu0.b32.start [1/16] %v373, 128
    %545 = vxpose.xlu0.b32.cont [2/16] 0.0, 128
    %546 = vxpose.xlu0.b32.cont [3/16] 0.0, 128
    %547 = vxpose.xlu0.b32.cont [4/16] 0.0, 128
    %548 = vxpose.xlu0.b32.cont [5/16] 0.0, 128
    %549 = vxpose.xlu0.b32.cont [6/16] 0.0, 128
    %550 = vxpose.xlu0.b32.cont [7/16] 0.0, 128
    %551 = vxpose.xlu0.b32.cont [8/16] 0.0, 128
    %552 = vxpose.xlu0.b32.cont [9/16] 0.0, 128
    %553 = vxpose.xlu0.b32.cont [10/16] 0.0, 128
    %554 = vxpose.xlu0.b32.cont [11/16] 0.0, 128
    %555 = vxpose.xlu0.b32.cont [12/16] 0.0, 128
    %556 = vxpose.xlu0.b32.cont [13/16] 0.0, 128
    %557 = vxpose.xlu0.b32.cont [14/16] 0.0, 128
    %558 = vxpose.xlu0.b32.cont [15/16] 0.0, 128
    %559 = vxpose.xlu0.b32.end [16/16] 0.0, 128
    %v560 = vpop.trf.xlu0
    %v561 = vpop.trf.xlu0
    %v562 = vpop.trf.xlu0
    %v563 = vpop.trf.xlu0
    %v564 = vpop.trf.xlu0
    %v565 = vpop.trf.xlu0
    %v566 = vpop.trf.xlu0
    %v567 = vpop.trf.xlu0
    %v568 = vpop.trf.xlu0
    %v569 = vpop.trf.xlu0
    %v570 = vpop.trf.xlu0
    %v571 = vpop.trf.xlu0
    %v572 = vpop.trf.xlu0
    %v573 = vpop.trf.xlu0
    %v574 = vpop.trf.xlu0
    %v575 = vpop.trf.xlu0
    %v577 = vsel %vm410, %v560, 0
    %579 = vmatpush.msra.mxu0 0.0
    %580 = vmatpush.msra.mxu0 0.0
    %581 = vmatpush.msra.mxu0 0.0
    %582 = vmatpush.msra.mxu0 0.0
    %583 = vmatpush.msra.mxu0 0.0
    %584 = vmatpush.msra.mxu0 0.0
    %585 = vmatpush.msra.mxu0 0.0
    %586 = vmatpush.msra.mxu0 0.0
    %587 = vmatpush.msra.mxu0 0.0
    %588 = vmatpush.msra.mxu0 0.0
    %589 = vmatpush.msra.mxu0 0.0
    %590 = vmatpush.msra.mxu0 0.0
    %591 = vmatpush.msra.mxu0 0.0
    %592 = vmatpush.msra.mxu0 0.0
    %593 = vmatpush.msra.mxu0 0.0
    %594 = vmatpush.msra.mxu0 %v49
    %595 = vmatmul.f32.gmra.mxu0 %v577
    %v596 = vpop.f32.mrf.mxu0
    %v597 = vadd.f32 0.0, %v596
    %598 = vdwg.mxu0
    %599 = vxpose.xlu0.b32.start [1/16] %v374, 128
    %600 = vxpose.xlu0.b32.cont [2/16] 0.0, 128
    %601 = vxpose.xlu0.b32.cont [3/16] 0.0, 128
    %602 = vxpose.xlu0.b32.cont [4/16] 0.0, 128
    %603 = vxpose.xlu0.b32.cont [5/16] 0.0, 128
    %604 = vxpose.xlu0.b32.cont [6/16] 0.0, 128
    %605 = vxpose.xlu0.b32.cont [7/16] 0.0, 128
    %606 = vxpose.xlu0.b32.cont [8/16] 0.0, 128
    %607 = vxpose.xlu0.b32.cont [9/16] 0.0, 128
    %608 = vxpose.xlu0.b32.cont [10/16] 0.0, 128
    %609 = vxpose.xlu0.b32.cont [11/16] 0.0, 128
    %610 = vxpose.xlu0.b32.cont [12/16] 0.0, 128
    %611 = vxpose.xlu0.b32.cont [13/16] 0.0, 128
    %612 = vxpose.xlu0.b32.cont [14/16] 0.0, 128
    %613 = vxpose.xlu0.b32.cont [15/16] 0.0, 128
    %614 = vxpose.xlu0.b32.end [16/16] 0.0, 128
    %v615 = vpop.trf.xlu0
    %v616 = vpop.trf.xlu0
    %v617 = vpop.trf.xlu0
    %v618 = vpop.trf.xlu0
    %v619 = vpop.trf.xlu0
    %v620 = vpop.trf.xlu0
    %v621 = vpop.trf.xlu0
    %v622 = vpop.trf.xlu0
    %v623 = vpop.trf.xlu0
    %v624 = vpop.trf.xlu0
    %v625 = vpop.trf.xlu0
    %v626 = vpop.trf.xlu0
    %v627 = vpop.trf.xlu0
    %v628 = vpop.trf.xlu0
    %v629 = vpop.trf.xlu0
    %v630 = vpop.trf.xlu0
    %v632 = vsel %vm410, %v615, 0
    %634 = vmatpush.msra.mxu0 0.0
    %635 = vmatpush.msra.mxu0 0.0
    %636 = vmatpush.msra.mxu0 0.0
    %637 = vmatpush.msra.mxu0 0.0
    %638 = vmatpush.msra.mxu0 0.0
    %639 = vmatpush.msra.mxu0 0.0
    %640 = vmatpush.msra.mxu0 0.0
    %641 = vmatpush.msra.mxu0 0.0
    %642 = vmatpush.msra.mxu0 0.0
    %643 = vmatpush.msra.mxu0 0.0
    %644 = vmatpush.msra.mxu0 0.0
    %645 = vmatpush.msra.mxu0 0.0
    %646 = vmatpush.msra.mxu0 0.0
    %647 = vmatpush.msra.mxu0 0.0
    %648 = vmatpush.msra.mxu0 0.0
    %649 = vmatpush.msra.mxu0 %v50
    %650 = vmatmul.f32.gmra.mxu0 %v632
    %v651 = vpop.f32.mrf.mxu0
    %v652 = vadd.f32 0.0, %v651
    %653 = vdwg.mxu0
    %654 = vxpose.xlu0.b32.start [1/16] %v375, 128
    %655 = vxpose.xlu0.b32.cont [2/16] 0.0, 128
    %656 = vxpose.xlu0.b32.cont [3/16] 0.0, 128
    %657 = vxpose.xlu0.b32.cont [4/16] 0.0, 128
    %658 = vxpose.xlu0.b32.cont [5/16] 0.0, 128
    %659 = vxpose.xlu0.b32.cont [6/16] 0.0, 128
    %660 = vxpose.xlu0.b32.cont [7/16] 0.0, 128
    %661 = vxpose.xlu0.b32.cont [8/16] 0.0, 128
    %662 = vxpose.xlu0.b32.cont [9/16] 0.0, 128
    %663 = vxpose.xlu0.b32.cont [10/16] 0.0, 128
    %664 = vxpose.xlu0.b32.cont [11/16] 0.0, 128
    %665 = vxpose.xlu0.b32.cont [12/16] 0.0, 128
    %666 = vxpose.xlu0.b32.cont [13/16] 0.0, 128
    %667 = vxpose.xlu0.b32.cont [14/16] 0.0, 128
    %668 = vxpose.xlu0.b32.cont [15/16] 0.0, 128
    %669 = vxpose.xlu0.b32.end [16/16] 0.0, 128
    %v670 = vpop.trf.xlu0
    %v671 = vpop.trf.xlu0
    %v672 = vpop.trf.xlu0
    %v673 = vpop.trf.xlu0
    %v674 = vpop.trf.xlu0
    %v675 = vpop.trf.xlu0
    %v676 = vpop.trf.xlu0
    %v677 = vpop.trf.xlu0
    %v678 = vpop.trf.xlu0
    %v679 = vpop.trf.xlu0
    %v680 = vpop.trf.xlu0
    %v681 = vpop.trf.xlu0
    %v682 = vpop.trf.xlu0
    %v683 = vpop.trf.xlu0
    %v684 = vpop.trf.xlu0
    %v685 = vpop.trf.xlu0
    %v687 = vsel %vm410, %v670, 0
    %689 = vmatpush.msra.mxu0 0.0
    %690 = vmatpush.msra.mxu0 0.0
    %691 = vmatpush.msra.mxu0 0.0
    %692 = vmatpush.msra.mxu0 0.0
    %693 = vmatpush.msra.mxu0 0.0
    %694 = vmatpush.msra.mxu0 0.0
    %695 = vmatpush.msra.mxu0 0.0
    %696 = vmatpush.msra.mxu0 0.0
    %697 = vmatpush.msra.mxu0 0.0
    %698 = vmatpush.msra.mxu0 0.0
    %699 = vmatpush.msra.mxu0 0.0
    %700 = vmatpush.msra.mxu0 0.0
    %701 = vmatpush.msra.mxu0 0.0
    %702 = vmatpush.msra.mxu0 0.0
    %703 = vmatpush.msra.mxu0 0.0
    %704 = vmatpush.msra.mxu0 %v51
    %705 = vmatmul.f32.gmra.mxu0 %v687
    %v706 = vpop.f32.mrf.mxu0
    %v707 = vadd.f32 0.0, %v706
    %708 = vdwg.mxu0
    %709 = vxpose.xlu0.b32.start [1/16] %v376, 128
    %710 = vxpose.xlu0.b32.cont [2/16] 0.0, 128
    %711 = vxpose.xlu0.b32.cont [3/16] 0.0, 128
    %712 = vxpose.xlu0.b32.cont [4/16] 0.0, 128
    %713 = vxpose.xlu0.b32.cont [5/16] 0.0, 128
    %714 = vxpose.xlu0.b32.cont [6/16] 0.0, 128
    %715 = vxpose.xlu0.b32.cont [7/16] 0.0, 128
    %716 = vxpose.xlu0.b32.cont [8/16] 0.0, 128
    %717 = vxpose.xlu0.b32.cont [9/16] 0.0, 128
    %718 = vxpose.xlu0.b32.cont [10/16] 0.0, 128
    %719 = vxpose.xlu0.b32.cont [11/16] 0.0, 128
    %720 = vxpose.xlu0.b32.cont [12/16] 0.0, 128
    %721 = vxpose.xlu0.b32.cont [13/16] 0.0, 128
    %722 = vxpose.xlu0.b32.cont [14/16] 0.0, 128
    %723 = vxpose.xlu0.b32.cont [15/16] 0.0, 128
    %724 = vxpose.xlu0.b32.end [16/16] 0.0, 128
    %v725 = vpop.trf.xlu0
    %v726 = vpop.trf.xlu0
    %v727 = vpop.trf.xlu0
    %v728 = vpop.trf.xlu0
    %v729 = vpop.trf.xlu0
    %v730 = vpop.trf.xlu0
    %v731 = vpop.trf.xlu0
    %v732 = vpop.trf.xlu0
    %v733 = vpop.trf.xlu0
    %v734 = vpop.trf.xlu0
    %v735 = vpop.trf.xlu0
    %v736 = vpop.trf.xlu0
    %v737 = vpop.trf.xlu0
    %v738 = vpop.trf.xlu0
    %v739 = vpop.trf.xlu0
    %v740 = vpop.trf.xlu0
    %v742 = vsel %vm410, %v725, 0
    %744 = vmatpush.msra.mxu0 0.0
    %745 = vmatpush.msra.mxu0 0.0
    %746 = vmatpush.msra.mxu0 0.0
    %747 = vmatpush.msra.mxu0 0.0
    %748 = vmatpush.msra.mxu0 0.0
    %749 = vmatpush.msra.mxu0 0.0
    %750 = vmatpush.msra.mxu0 0.0
    %751 = vmatpush.msra.mxu0 0.0
    %752 = vmatpush.msra.mxu0 0.0
    %753 = vmatpush.msra.mxu0 0.0
    %754 = vmatpush.msra.mxu0 0.0
    %755 = vmatpush.msra.mxu0 0.0
    %756 = vmatpush.msra.mxu0 0.0
    %757 = vmatpush.msra.mxu0 0.0
    %758 = vmatpush.msra.mxu0 0.0
    %759 = vmatpush.msra.mxu0 %v52
    %760 = vmatmul.f32.gmra.mxu0 %v742
    %v761 = vpop.f32.mrf.mxu0
    %v762 = vadd.f32 0.0, %v761
    %763 = vdwg.mxu0
    %764 = vxpose.xlu0.b32.start [1/16] %v377, 128
    %765 = vxpose.xlu0.b32.cont [2/16] 0.0, 128
    %766 = vxpose.xlu0.b32.cont [3/16] 0.0, 128
    %767 = vxpose.xlu0.b32.cont [4/16] 0.0, 128
    %768 = vxpose.xlu0.b32.cont [5/16] 0.0, 128
    %769 = vxpose.xlu0.b32.cont [6/16] 0.0, 128
    %770 = vxpose.xlu0.b32.cont [7/16] 0.0, 128
    %771 = vxpose.xlu0.b32.cont [8/16] 0.0, 128
    %772 = vxpose.xlu0.b32.cont [9/16] 0.0, 128
    %773 = vxpose.xlu0.b32.cont [10/16] 0.0, 128
    %774 = vxpose.xlu0.b32.cont [11/16] 0.0, 128
    %775 = vxpose.xlu0.b32.cont [12/16] 0.0, 128
    %776 = vxpose.xlu0.b32.cont [13/16] 0.0, 128
    %777 = vxpose.xlu0.b32.cont [14/16] 0.0, 128
    %778 = vxpose.xlu0.b32.cont [15/16] 0.0, 128
    %779 = vxpose.xlu0.b32.end [16/16] 0.0, 128
    %v780 = vpop.trf.xlu0
    %v781 = vpop.trf.xlu0
    %v782 = vpop.trf.xlu0
    %v783 = vpop.trf.xlu0
    %v784 = vpop.trf.xlu0
    %v785 = vpop.trf.xlu0
    %v786 = vpop.trf.xlu0
    %v787 = vpop.trf.xlu0
    %v788 = vpop.trf.xlu0
    %v789 = vpop.trf.xlu0
    %v790 = vpop.trf.xlu0
    %v791 = vpop.trf.xlu0
    %v792 = vpop.trf.xlu0
    %v793 = vpop.trf.xlu0
    %v794 = vpop.trf.xlu0
    %v795 = vpop.trf.xlu0
    %v797 = vsel %vm410, %v780, 0
    %799 = vmatpush.msra.mxu0 0.0
    %800 = vmatpush.msra.mxu0 0.0
    %801 = vmatpush.msra.mxu0 0.0
    %802 = vmatpush.msra.mxu0 0.0
    %803 = vmatpush.msra.mxu0 0.0
    %804 = vmatpush.msra.mxu0 0.0
    %805 = vmatpush.msra.mxu0 0.0
    %806 = vmatpush.msra.mxu0 0.0
    %807 = vmatpush.msra.mxu0 0.0
    %808 = vmatpush.msra.mxu0 0.0
    %809 = vmatpush.msra.mxu0 0.0
    %810 = vmatpush.msra.mxu0 0.0
    %811 = vmatpush.msra.mxu0 0.0
    %812 = vmatpush.msra.mxu0 0.0
    %813 = vmatpush.msra.mxu0 0.0
    %814 = vmatpush.msra.mxu0 %v53
    %815 = vmatmul.f32.gmra.mxu0 %v797
    %v816 = vpop.f32.mrf.mxu0
    %v817 = vadd.f32 0.0, %v816
    %818 = vdwg.mxu0
    %v819 = vld [vmem:[#allocation2] sm:$0xff]
    %v820 = vld [vmem:[#allocation2 + $0x8] sm:$0xff]
    %v821 = vld [vmem:[#allocation2 + $0x10] sm:$0xff]
    %v822 = vld [vmem:[#allocation2 + $0x18] sm:$0xff]
    %s823 = scalar_lea.vmem [#allocation2], 32
    %v824 = vld [vmem:[%s823] sm:$0xff]
    %v825 = vld [vmem:[%s823 + $0x8] sm:$0xff]
    %v826 = vld [vmem:[%s823 + $0x10] sm:$0xff]
    %v827 = vld [vmem:[%s823 + $0x18] sm:$0xff]
    %v836 = vrot.slane %v432, 1
    %vm837 = vcmask 1041409
    %v838 = vsel %vm837, %v487, %v836
    %v839 = vrot.slane %v542, 7
    %vm840 = vcmask 1042434
    %v841 = vsel %vm840, %v839, %v838
    %v842 = vrot.slane %v597, 6
    %vm843 = vcmask 1043459
    %v844 = vsel %vm843, %v842, %v841
    %v845 = vrot.slane %v652, 5
    %vm846 = vcmask 1044484
    %v847 = vsel %vm846, %v845, %v844
    %v848 = vrot.slane %v707, 4
    %vm849 = vcmask 1045509
    %v850 = vsel %vm849, %v848, %v847
    %v851 = vrot.slane %v762, 3
    %vm852 = vcmask 1046534
    %v853 = vsel %vm852, %v851, %v850
    %v854 = vrot.slane %v817, 2
    %vm855 = vcmask 1047559
    %v856 = vsel %vm855, %v854, %v853
    %v857 = vsel %vm62, %v856, 0
    %859 = vmatpush.msra.mxu0 0.0
    %860 = vmatpush.msra.mxu0 0.0
    %861 = vmatpush.msra.mxu0 0.0
    %862 = vmatpush.msra.mxu0 0.0
    %863 = vmatpush.msra.mxu0 0.0
    %864 = vmatpush.msra.mxu0 0.0
    %865 = vmatpush.msra.mxu0 0.0
    %866 = vmatpush.msra.mxu0 0.0
    %867 = vmatpush.msra.mxu0 0.0
    %868 = vmatpush.msra.mxu0 0.0
    %869 = vmatpush.msra.mxu0 0.0
    %870 = vmatpush.msra.mxu0 0.0
    %871 = vmatpush.msra.mxu0 %v827
    %872 = vmatpush.msra.mxu0 %v826
    %873 = vmatpush.msra.mxu0 %v825
    %874 = vmatpush.msra.mxu0 %v824
    %875 = vmatmul.f32.gmra.mxu0 %v857
    %v876 = vpop.f32.mrf.mxu0
    %v877 = vadd.f32 0.0, %v876
    %878 = vdwg.mxu0
    %v879 = vrot.slane %v487, 7
    %v880 = vsel %vm837, %v879, %v432
    %v881 = vrot.slane %v542, 6
    %v882 = vsel %vm840, %v881, %v880
    %v883 = vrot.slane %v597, 5
    %v884 = vsel %vm843, %v883, %v882
    %v885 = vrot.slane %v652, 4
    %v886 = vsel %vm846, %v885, %v884
    %v887 = vrot.slane %v707, 3
    %v888 = vsel %vm849, %v887, %v886
    %v889 = vrot.slane %v762, 2
    %v890 = vsel %vm852, %v889, %v888
    %v891 = vrot.slane %v817, 1
    %v892 = vsel %vm855, %v891, %v890
    %v893 = vsel %vm62, %v892, 0
    %895 = vmatpush.msra.mxu0 0.0
    %896 = vmatpush.msra.mxu0 0.0
    %897 = vmatpush.msra.mxu0 0.0
    %898 = vmatpush.msra.mxu0 0.0
    %899 = vmatpush.msra.mxu0 0.0
    %900 = vmatpush.msra.mxu0 0.0
    %901 = vmatpush.msra.mxu0 0.0
    %902 = vmatpush.msra.mxu0 0.0
    %903 = vmatpush.msra.mxu0 0.0
    %904 = vmatpush.msra.mxu0 0.0
    %905 = vmatpush.msra.mxu0 0.0
    %906 = vmatpush.msra.mxu0 0.0
    %907 = vmatpush.msra.mxu0 %v822
    %908 = vmatpush.msra.mxu0 %v821
    %909 = vmatpush.msra.mxu0 %v820
    %910 = vmatpush.msra.mxu0 %v819
    %911 = vmatmul.f32.gmra.mxu0 %v893
    %v912 = vpop.f32.mrf.mxu0
    %v913 = vadd.f32 %v877, %v912
    %914 = vdwg.mxu0
    %v915 = vld [vmem:[%s7] sm:$0x1]
    %v917 = vperm.slane %v915, 0
    %v919 = vadd.f32 %v913, %v917
    %920 = vst [vmem:[#allocation5] sm:$0xff] %v919
    // Predicated region
    $region38: #{tpu_custom_call.1} parent=1 // pred_check
      _
    $region39: #{tpu_custom_call.1} parent=1 // pred_check_branch
      %922 = sbr.rel (0) target = $region41
    $region40: #{tpu_custom_call.1} parent=1 // pred_region
      %924 = vsyncadd [#allocation4], 0
      %s926 = sshll.u32 [#allocation5], 4
      %s927 = int_to_ptr.vmem [resolvable:$true] %s926
      %s928 = sshll.u32 %s8, 4
      %s929 = int_to_ptr.hbm [resolvable:$true] %s928
      %931 = dma.vmem_to_hbm [thread:$0]  %s927, 128, %s929, [#allocation4]
    $region41: #{tpu_custom_call.1} parent=1 // pred_fallthru
      _
    // Predicated region
    $region42: #{tpu_custom_call.1} parent=1 // pred_check
      _
    $region43: #{tpu_custom_call.1} parent=1 // pred_check_branch
      %933 = sbr.rel (0) target = $region45
    $region44: #{tpu_custom_call.1} parent=1 // pred_region
      %935 = dma.done [#allocation4], 128
    $region45: #{tpu_custom_call.1} parent=1 // pred_fallthru
      _
    %936 = vsyncpa [#allocation3], 1
    %937 = vsyncpa [#allocation4], 1

</llo_original>
